<compile_context>
chip_gen: v7x
topology: tpu7x:2x2x1
jax: 0.10.0
libtpu: 0.0.40
codegen_flags: <defaults>
</compile_context>

<pallas_src>
import jax
import jax.numpy as jnp
from jax.experimental import pallas as pl
from jax.experimental.pallas import tpu as pltpu

# SELU constants (match torch.nn.functional.selu)
_SELU_ALPHA = 1.6732632423543772
_SELU_SCALE = 1.0507009873554805

_LANE = 128      # TPU vreg lane width — pad all hidden/output widths to this
_SUBLANE = 8


def _round_up(n, m):
    return ((n + m - 1) // m) * m


def _selu(x):
    return _SELU_SCALE * jnp.where(x > 0, x, _SELU_ALPHA * (jnp.exp(x) - 1.0))


def _mlp_kernel(x_ref,
                w1_ref, b1_ref,
                w2_ref, b2_ref,
                w3_ref, b3_ref,
                w4_ref, b4_ref,
                w5_ref, b5_ref,
                o_ref):
    """One batch tile of the 5-layer MLP; all parameters are VMEM-resident."""
    h = x_ref[...]
    h = _selu(jnp.dot(h, w1_ref[...], preferred_element_type=jnp.float32)
              + b1_ref[...])
    h = _selu(jnp.dot(h, w2_ref[...], preferred_element_type=jnp.float32)
              + b2_ref[...])
    h = _selu(jnp.dot(h, w3_ref[...], preferred_element_type=jnp.float32)
              + b3_ref[...])
    h = _selu(jnp.dot(h, w4_ref[...], preferred_element_type=jnp.float32)
              + b4_ref[...])
    logit = (jnp.dot(h, w5_ref[...], preferred_element_type=jnp.float32)
             + b5_ref[...])

    # Numerically-stable sigmoid:  x>=0 -> 1/(1+e^-x),  x<0 -> e^x/(1+e^x).
    # exp on the EUP; approx reciprocal also on the EUP; one Newton step (VPU)
    # restores full f32 accuracy (denom is in (1, 2], so no overflow hazards).
    z = jnp.exp(-jnp.abs(logit))
    denom = 1.0 + z
    r = pl.reciprocal(denom, approx=True)
    r = r * (2.0 - denom * r)                       # Newton refinement
    o_ref[...] = jnp.where(logit >= 0, r, z * r)


def _pad_params_for_kernel(params):
    """Zero-pad every layer's output width (and the following layer's input
    width) up to 128 lanes.  SELU(0) == 0, so padded channels stay zero and
    the computation is exactly equivalent to the unpadded network."""
    padded = []
    prev_out_padded = None
    for (w, b) in params:
        fan_in, fan_out = w.shape
        in_p = fan_in if prev_out_padded is None else prev_out_padded
        out_p = _round_up(fan_out, _LANE)
        wp = jnp.zeros((in_p, out_p), jnp.float32).at[:fan_in, :fan_out].set(w)
        bp = jnp.zeros((1, out_p), jnp.float32).at[:, :fan_out].set(b)
        padded.append((wp, bp))
        prev_out_padded = out_p
    return padded


def lagrange_net_forward(x, padded_params, *, tile_b=512):
    """Run the full MLP forward pass with a batch-tiled Pallas kernel.

    x:             (batch, n_features) float32
    padded_params: output of _pad_params_for_kernel
    returns:       (batch, 1) float32
    """
    batch, nf = x.shape
    out_w = padded_params[-1][0].shape[1]          # padded output width (128)

    # Batch tile: multiple of 8 sublanes, capped at tile_b; tiny VMEM footprint
    # (< 2 MiB at tile_b=512), comfortably inside v7x's 64 MiB.
    tile_b = min(tile_b, _round_up(batch, _SUBLANE))
    tile_b = _round_up(tile_b, _SUBLANE)
    padded_batch = _round_up(batch, tile_b)
    if padded_batch != batch:
        x = jnp.pad(x, ((0, padded_batch - batch), (0, 0)))

    grid = (padded_batch // tile_b,)

    flat_params = []
    in_specs = [pl.BlockSpec((tile_b, nf), lambda i: (i, 0))]     # x tile
    for (w, b) in padded_params:
        flat_params.append(w)
        flat_params.append(b)
        # Constant block index -> parameter stays resident, DMA'd only once.
        in_specs.append(pl.BlockSpec(w.shape, lambda i: (0, 0)))
        in_specs.append(pl.BlockSpec(b.shape, lambda i: (0, 0)))

    # Advisory cost estimate for XLA's scheduler.
    flops = 2 * padded_batch * sum(w.shape[0] * w.shape[1]
                                   for w, _ in padded_params)
    transcendentals = padded_batch * (sum(w.shape[1] for w, _ in padded_params)
                                      + out_w)
    bytes_accessed = 4 * (x.size
                          + sum(w.size + b.size for w, b in padded_params)
                          + padded_batch * out_w)

    out = pl.pallas_call(
        _mlp_kernel,
        grid=grid,
        in_specs=in_specs,
        out_specs=pl.BlockSpec((tile_b, out_w), lambda i: (i, 0)),
        out_shape=jax.ShapeDtypeStruct((padded_batch, out_w), jnp.float32),
        compiler_params=pltpu.CompilerParams(
            dimension_semantics=("parallel",),
            vmem_limit_bytes=32 * 1024 * 1024,
        ),
        cost_estimate=pl.CostEstimate(
            flops=flops,
            transcendentals=transcendentals,
            bytes_accessed=bytes_accessed,
        ),
    )(x, *flat_params)

    # Drop batch padding and the 127 zero-padded output columns.
    return out[:batch, :1]


def init_params(key, n_features):
    """Deterministic parameter init mirroring the PyTorch layer shapes.

    Weights stored as (in, out) so the kernel computes x @ W + b
    (== PyTorch's x @ weight.T + bias); biases as (1, out)."""
    dims = [
        (n_features, n_features * 10),
        (n_features * 10, n_features * 10),
        (n_features * 10, n_features * 5),
        (n_features * 5, n_features * 2),
        (n_features * 2, 1),
    ]
    params = []
    for (fan_in, fan_out) in dims:
        key, kw, kb = jax.random.split(key, 3)
        bound = 1.0 / jnp.sqrt(jnp.float32(fan_in))
        w = jax.random.uniform(kw, (fan_in, fan_out), jnp.float32,
                               minval=-bound, maxval=bound)
        b = jax.random.uniform(kb, (1, fan_out), jnp.float32,
                               minval=-bound, maxval=bound)
        params.append((w, b))
    return params


def reference_forward(x, params):
    """Plain-JAX reference (unpadded parameters) for correctness checking."""
    h = x
    for (w, b) in params[:-1]:
        h = _selu(h @ w + b)
    w, b = params[-1]
    logit = h @ w + b
    return 1.0 / (1.0 + jnp.exp(-logit))


if __name__ == "__main__":
    n_features = 8
    batch = 16
    lambda_init = 1.0  # self.lam is unused in forward(); kept for parity

    key = jax.random.PRNGKey(0)
    key, kx = jax.random.split(key)
    x = jax.random.normal(kx, (batch, n_features), jnp.float32)

    params = init_params(key, n_features)
    padded_params = _pad_params_for_kernel(params)

    out = lagrange_net_forward(x, padded_params, tile_b=512)
    out = jax.block_until_ready(out)

    ref = reference_forward(x, params)
    assert out.shape == (batch, 1)
    assert jnp.allclose(out, ref, atol=1e-4, rtol=1e-4), "mismatch vs reference"

    print("KERNEL_OK")
</pallas_src>

<mosaic_0001>
module attributes {stable_mosaic.version = 11 : i64} {
  func.func @_mlp_kernel(%arg0: i32, %arg1: memref<16x8xf32, #tpu.memory_space<vmem>>, %arg2: memref<8x128xf32, #tpu.memory_space<vmem>>, %arg3: memref<1x128xf32, #tpu.memory_space<vmem>>, %arg4: memref<128x128xf32, #tpu.memory_space<vmem>>, %arg5: memref<1x128xf32, #tpu.memory_space<vmem>>, %arg6: memref<128x128xf32, #tpu.memory_space<vmem>>, %arg7: memref<1x128xf32, #tpu.memory_space<vmem>>, %arg8: memref<128x128xf32, #tpu.memory_space<vmem>>, %arg9: memref<1x128xf32, #tpu.memory_space<vmem>>, %arg10: memref<128x128xf32, #tpu.memory_space<vmem>>, %arg11: memref<1x128xf32, #tpu.memory_space<vmem>>, %arg12: memref<16x128xf32, #tpu.memory_space<vmem>>) attributes {dimension_semantics = [#tpu.dimension_semantics<parallel>], iteration_bounds = array<i64: 1>, scalar_prefetch = 0 : i64, scratch_operands = 0 : i64, tpu.core_type = #tpu.core_type<tc>, window_params = [{transform_indices = @transform_0, window_bounds = array<i64: 16, 8>}, {pipeline_mode = #tpu.pipeline_mode<synchronous>, transform_indices = @transform_1, window_bounds = array<i64: 8, 128>}, {pipeline_mode = #tpu.pipeline_mode<synchronous>, transform_indices = @transform_2, window_bounds = array<i64: 1, 128>}, {pipeline_mode = #tpu.pipeline_mode<synchronous>, transform_indices = @transform_3, window_bounds = array<i64: 128, 128>}, {pipeline_mode = #tpu.pipeline_mode<synchronous>, transform_indices = @transform_4, window_bounds = array<i64: 1, 128>}, {pipeline_mode = #tpu.pipeline_mode<synchronous>, transform_indices = @transform_5, window_bounds = array<i64: 128, 128>}, {pipeline_mode = #tpu.pipeline_mode<synchronous>, transform_indices = @transform_6, window_bounds = array<i64: 1, 128>}, {pipeline_mode = #tpu.pipeline_mode<synchronous>, transform_indices = @transform_7, window_bounds = array<i64: 128, 128>}, {pipeline_mode = #tpu.pipeline_mode<synchronous>, transform_indices = @transform_8, window_bounds = array<i64: 1, 128>}, {pipeline_mode = #tpu.pipeline_mode<synchronous>, transform_indices = @transform_9, window_bounds = array<i64: 128, 128>}, {pipeline_mode = #tpu.pipeline_mode<synchronous>, transform_indices = @transform_10, window_bounds = array<i64: 1, 128>}, {transform_indices = @transform_11, window_bounds = array<i64: 16, 128>}]} {
    %c0 = arith.constant 0 : index
    %c0_0 = arith.constant 0 : index
    %0 = vector.load %arg1[%c0, %c0_0] : memref<16x8xf32, #tpu.memory_space<vmem>>, vector<16x8xf32>
    %c0_1 = arith.constant 0 : index
    %c0_2 = arith.constant 0 : index
    %1 = vector.load %arg2[%c0_1, %c0_2] : memref<8x128xf32, #tpu.memory_space<vmem>>, vector<8x128xf32>
    %cst = arith.constant dense<0.000000e+00> : vector<16x128xf32>
    %2 = tpu.matmul %0, %1, %cst {dimension_numbers = #tpu.dot_dimension_numbers<[1], [0], [0], [1], [0, 0, 1, 1], [], []>} : vector<16x8xf32>, vector<8x128xf32>, vector<16x128xf32> -> vector<16x128xf32>
    %c0_3 = arith.constant 0 : index
    %c0_4 = arith.constant 0 : index
    %3 = vector.load %arg3[%c0_3, %c0_4] : memref<1x128xf32, #tpu.memory_space<vmem>>, vector<1x128xf32>
    %4 = vector.broadcast %3 : vector<1x128xf32> to vector<16x128xf32>
    %5 = arith.addf %2, %4 : vector<16x128xf32>
    %cst_5 = arith.constant 0.000000e+00 : f32
    %6 = vector.broadcast %cst_5 : f32 to vector<16x128xf32>
    %7 = arith.cmpf ogt, %5, %6 : vector<16x128xf32>
    %8 = math.exp %5 : vector<16x128xf32>
    %cst_6 = arith.constant 1.000000e+00 : f32
    %9 = vector.broadcast %cst_6 : f32 to vector<16x128xf32>
    %10 = arith.subf %8, %9 : vector<16x128xf32>
    %cst_7 = arith.constant 1.67326319 : f32
    %11 = vector.broadcast %cst_7 : f32 to vector<16x128xf32>
    %12 = arith.mulf %11, %10 : vector<16x128xf32>
    %13 = arith.select %7, %5, %12 : vector<16x128xi1>, vector<16x128xf32>
    %cst_8 = arith.constant 1.05070102 : f32
    %14 = vector.broadcast %cst_8 : f32 to vector<16x128xf32>
    %15 = arith.mulf %14, %13 : vector<16x128xf32>
    %c0_9 = arith.constant 0 : index
    %c0_10 = arith.constant 0 : index
    %16 = vector.load %arg4[%c0_9, %c0_10] : memref<128x128xf32, #tpu.memory_space<vmem>>, vector<128x128xf32>
    %cst_11 = arith.constant dense<0.000000e+00> : vector<16x128xf32>
    %17 = tpu.matmul %15, %16, %cst_11 {dimension_numbers = #tpu.dot_dimension_numbers<[1], [0], [0], [1], [0, 0, 1, 1], [], []>} : vector<16x128xf32>, vector<128x128xf32>, vector<16x128xf32> -> vector<16x128xf32>
    %c0_12 = arith.constant 0 : index
    %c0_13 = arith.constant 0 : index
    %18 = vector.load %arg5[%c0_12, %c0_13] : memref<1x128xf32, #tpu.memory_space<vmem>>, vector<1x128xf32>
    %19 = vector.broadcast %18 : vector<1x128xf32> to vector<16x128xf32>
    %20 = arith.addf %17, %19 : vector<16x128xf32>
    %cst_14 = arith.constant 0.000000e+00 : f32
    %21 = vector.broadcast %cst_14 : f32 to vector<16x128xf32>
    %22 = arith.cmpf ogt, %20, %21 : vector<16x128xf32>
    %23 = math.exp %20 : vector<16x128xf32>
    %cst_15 = arith.constant 1.000000e+00 : f32
    %24 = vector.broadcast %cst_15 : f32 to vector<16x128xf32>
    %25 = arith.subf %23, %24 : vector<16x128xf32>
    %cst_16 = arith.constant 1.67326319 : f32
    %26 = vector.broadcast %cst_16 : f32 to vector<16x128xf32>
    %27 = arith.mulf %26, %25 : vector<16x128xf32>
    %28 = arith.select %22, %20, %27 : vector<16x128xi1>, vector<16x128xf32>
    %cst_17 = arith.constant 1.05070102 : f32
    %29 = vector.broadcast %cst_17 : f32 to vector<16x128xf32>
    %30 = arith.mulf %29, %28 : vector<16x128xf32>
    %c0_18 = arith.constant 0 : index
    %c0_19 = arith.constant 0 : index
    %31 = vector.load %arg6[%c0_18, %c0_19] : memref<128x128xf32, #tpu.memory_space<vmem>>, vector<128x128xf32>
    %cst_20 = arith.constant dense<0.000000e+00> : vector<16x128xf32>
    %32 = tpu.matmul %30, %31, %cst_20 {dimension_numbers = #tpu.dot_dimension_numbers<[1], [0], [0], [1], [0, 0, 1, 1], [], []>} : vector<16x128xf32>, vector<128x128xf32>, vector<16x128xf32> -> vector<16x128xf32>
    %c0_21 = arith.constant 0 : index
    %c0_22 = arith.constant 0 : index
    %33 = vector.load %arg7[%c0_21, %c0_22] : memref<1x128xf32, #tpu.memory_space<vmem>>, vector<1x128xf32>
    %34 = vector.broadcast %33 : vector<1x128xf32> to vector<16x128xf32>
    %35 = arith.addf %32, %34 : vector<16x128xf32>
    %cst_23 = arith.constant 0.000000e+00 : f32
    %36 = vector.broadcast %cst_23 : f32 to vector<16x128xf32>
    %37 = arith.cmpf ogt, %35, %36 : vector<16x128xf32>
    %38 = math.exp %35 : vector<16x128xf32>
    %cst_24 = arith.constant 1.000000e+00 : f32
    %39 = vector.broadcast %cst_24 : f32 to vector<16x128xf32>
    %40 = arith.subf %38, %39 : vector<16x128xf32>
    %cst_25 = arith.constant 1.67326319 : f32
    %41 = vector.broadcast %cst_25 : f32 to vector<16x128xf32>
    %42 = arith.mulf %41, %40 : vector<16x128xf32>
    %43 = arith.select %37, %35, %42 : vector<16x128xi1>, vector<16x128xf32>
    %cst_26 = arith.constant 1.05070102 : f32
    %44 = vector.broadcast %cst_26 : f32 to vector<16x128xf32>
    %45 = arith.mulf %44, %43 : vector<16x128xf32>
    %c0_27 = arith.constant 0 : index
    %c0_28 = arith.constant 0 : index
    %46 = vector.load %arg8[%c0_27, %c0_28] : memref<128x128xf32, #tpu.memory_space<vmem>>, vector<128x128xf32>
    %cst_29 = arith.constant dense<0.000000e+00> : vector<16x128xf32>
    %47 = tpu.matmul %45, %46, %cst_29 {dimension_numbers = #tpu.dot_dimension_numbers<[1], [0], [0], [1], [0, 0, 1, 1], [], []>} : vector<16x128xf32>, vector<128x128xf32>, vector<16x128xf32> -> vector<16x128xf32>
    %c0_30 = arith.constant 0 : index
    %c0_31 = arith.constant 0 : index
    %48 = vector.load %arg9[%c0_30, %c0_31] : memref<1x128xf32, #tpu.memory_space<vmem>>, vector<1x128xf32>
    %49 = vector.broadcast %48 : vector<1x128xf32> to vector<16x128xf32>
    %50 = arith.addf %47, %49 : vector<16x128xf32>
    %cst_32 = arith.constant 0.000000e+00 : f32
    %51 = vector.broadcast %cst_32 : f32 to vector<16x128xf32>
    %52 = arith.cmpf ogt, %50, %51 : vector<16x128xf32>
    %53 = math.exp %50 : vector<16x128xf32>
    %cst_33 = arith.constant 1.000000e+00 : f32
    %54 = vector.broadcast %cst_33 : f32 to vector<16x128xf32>
    %55 = arith.subf %53, %54 : vector<16x128xf32>
    %cst_34 = arith.constant 1.67326319 : f32
    %56 = vector.broadcast %cst_34 : f32 to vector<16x128xf32>
    %57 = arith.mulf %56, %55 : vector<16x128xf32>
    %58 = arith.select %52, %50, %57 : vector<16x128xi1>, vector<16x128xf32>
    %cst_35 = arith.constant 1.05070102 : f32
    %59 = vector.broadcast %cst_35 : f32 to vector<16x128xf32>
    %60 = arith.mulf %59, %58 : vector<16x128xf32>
    %c0_36 = arith.constant 0 : index
    %c0_37 = arith.constant 0 : index
    %61 = vector.load %arg10[%c0_36, %c0_37] : memref<128x128xf32, #tpu.memory_space<vmem>>, vector<128x128xf32>
    %cst_38 = arith.constant dense<0.000000e+00> : vector<16x128xf32>
    %62 = tpu.matmul %60, %61, %cst_38 {dimension_numbers = #tpu.dot_dimension_numbers<[1], [0], [0], [1], [0, 0, 1, 1], [], []>} : vector<16x128xf32>, vector<128x128xf32>, vector<16x128xf32> -> vector<16x128xf32>
    %c0_39 = arith.constant 0 : index
    %c0_40 = arith.constant 0 : index
    %63 = vector.load %arg11[%c0_39, %c0_40] : memref<1x128xf32, #tpu.memory_space<vmem>>, vector<1x128xf32>
    %64 = vector.broadcast %63 : vector<1x128xf32> to vector<16x128xf32>
    %65 = arith.addf %62, %64 : vector<16x128xf32>
    %66 = math.absf %65 : vector<16x128xf32>
    %cst_41 = arith.constant 0.000000e+00 : f32
    %67 = vector.broadcast %cst_41 : f32 to vector<16x128xf32>
    %68 = arith.subf %67, %66 : vector<16x128xf32>
    %69 = math.exp %68 : vector<16x128xf32>
    %cst_42 = arith.constant 1.000000e+00 : f32
    %70 = vector.broadcast %cst_42 : f32 to vector<16x128xf32>
    %71 = arith.addf %70, %69 : vector<16x128xf32>
    %72 = tpu.reciprocal %71 {approx = true} : vector<16x128xf32> -> vector<16x128xf32>
    %73 = arith.mulf %71, %72 : vector<16x128xf32>
    %cst_43 = arith.constant 2.000000e+00 : f32
    %74 = vector.broadcast %cst_43 : f32 to vector<16x128xf32>
    %75 = arith.subf %74, %73 : vector<16x128xf32>
    %76 = arith.mulf %72, %75 : vector<16x128xf32>
    %cst_44 = arith.constant 0.000000e+00 : f32
    %77 = vector.broadcast %cst_44 : f32 to vector<16x128xf32>
    %78 = arith.cmpf oge, %65, %77 : vector<16x128xf32>
    %79 = arith.mulf %69, %76 : vector<16x128xf32>
    %80 = arith.select %78, %76, %79 : vector<16x128xi1>, vector<16x128xf32>
    %c0_45 = arith.constant 0 : index
    %c0_46 = arith.constant 0 : index
    %81 = vector.load %arg12[%c0_45, %c0_46] : memref<16x128xf32, #tpu.memory_space<vmem>>, vector<16x128xf32>
    tpu.vector_store %arg12[%c0_45, %c0_46], %80 {strides = array<i32>} : memref<16x128xf32, #tpu.memory_space<vmem>>, vector<16x128xf32>,
    return
  }
  func.func @transform_0(%arg0: i32) -> (i32, i32) {
    %c0_i32 = arith.constant 0 : i32
    %c0_i32_0 = arith.constant 0 : i32
    return %arg0, %c0_i32 : i32, i32
  }
  func.func @transform_1(%arg0: i32) -> (i32, i32) {
    %c0_i32 = arith.constant 0 : i32
    %c0_i32_0 = arith.constant 0 : i32
    %c0_i32_1 = arith.constant 0 : i32
    return %c0_i32, %c0_i32_0 : i32, i32
  }
  func.func @transform_2(%arg0: i32) -> (i32, i32) {
    %c0_i32 = arith.constant 0 : i32
    %c0_i32_0 = arith.constant 0 : i32
    %c0_i32_1 = arith.constant 0 : i32
    return %c0_i32, %c0_i32_0 : i32, i32
  }
  func.func @transform_3(%arg0: i32) -> (i32, i32) {
    %c0_i32 = arith.constant 0 : i32
    %c0_i32_0 = arith.constant 0 : i32
    %c0_i32_1 = arith.constant 0 : i32
    return %c0_i32, %c0_i32_0 : i32, i32
  }
  func.func @transform_4(%arg0: i32) -> (i32, i32) {
    %c0_i32 = arith.constant 0 : i32
    %c0_i32_0 = arith.constant 0 : i32
    %c0_i32_1 = arith.constant 0 : i32
    return %c0_i32, %c0_i32_0 : i32, i32
  }
  func.func @transform_5(%arg0: i32) -> (i32, i32) {
    %c0_i32 = arith.constant 0 : i32
    %c0_i32_0 = arith.constant 0 : i32
    %c0_i32_1 = arith.constant 0 : i32
    return %c0_i32, %c0_i32_0 : i32, i32
  }
  func.func @transform_6(%arg0: i32) -> (i32, i32) {
    %c0_i32 = arith.constant 0 : i32
    %c0_i32_0 = arith.constant 0 : i32
    %c0_i32_1 = arith.constant 0 : i32
    return %c0_i32, %c0_i32_0 : i32, i32
  }
  func.func @transform_7(%arg0: i32) -> (i32, i32) {
    %c0_i32 = arith.constant 0 : i32
    %c0_i32_0 = arith.constant 0 : i32
    %c0_i32_1 = arith.constant 0 : i32
    return %c0_i32, %c0_i32_0 : i32, i32
  }
  func.func @transform_8(%arg0: i32) -> (i32, i32) {
    %c0_i32 = arith.constant 0 : i32
    %c0_i32_0 = arith.constant 0 : i32
    %c0_i32_1 = arith.constant 0 : i32
    return %c0_i32, %c0_i32_0 : i32, i32
  }
  func.func @transform_9(%arg0: i32) -> (i32, i32) {
    %c0_i32 = arith.constant 0 : i32
    %c0_i32_0 = arith.constant 0 : i32
    %c0_i32_1 = arith.constant 0 : i32
    return %c0_i32, %c0_i32_0 : i32, i32
  }
  func.func @transform_10(%arg0: i32) -> (i32, i32) {
    %c0_i32 = arith.constant 0 : i32
    %c0_i32_0 = arith.constant 0 : i32
    %c0_i32_1 = arith.constant 0 : i32
    return %c0_i32, %c0_i32_0 : i32, i32
  }
  func.func @transform_11(%arg0: i32) -> (i32, i32) {
    %c0_i32 = arith.constant 0 : i32
    %c0_i32_0 = arith.constant 0 : i32
    return %arg0, %c0_i32 : i32, i32
  }
}

</mosaic_0001>

<llo_original>
// kernel: tpu_custom_call.1
$region0: #{tpu_custom_call.1}
  #allocation0 [shape = 'u32[]', space=smem, size = 0x4, offset = 0x4, fixed_abs, tag = 'smem constant byte address 0x4 - core index']
  #allocation1 [shape = 'u32[144,128]{1,0:T(1,128)}', space=vmem, size = 0x12000, scoped, tag = 'internal scratch']
  %s0 = inlined_call_operand.vmem [shape: f32[16,8], index: 0, kind: input, shape index: {}]
  %s1 = inlined_call_operand.vmem [shape: f32[8,128], index: 1, kind: input, shape index: {}]
  %s2 = inlined_call_operand.vmem [shape: f32[1,128], index: 2, kind: input, shape index: {}]
  %s3 = inlined_call_operand.hbm [shape: f32[128,128], index: 3, kind: input, shape index: {}]
  %s4 = inlined_call_operand.vmem [shape: f32[1,128], index: 4, kind: input, shape index: {}]
  %s5 = inlined_call_operand.hbm [shape: f32[128,128], index: 5, kind: input, shape index: {}]
  %s6 = inlined_call_operand.vmem [shape: f32[1,128], index: 6, kind: input, shape index: {}]
  %s7 = inlined_call_operand.hbm [shape: f32[128,128], index: 7, kind: input, shape index: {}]
  %s8 = inlined_call_operand.vmem [shape: f32[1,128], index: 8, kind: input, shape index: {}]
  %s9 = inlined_call_operand.hbm [shape: f32[128,128], index: 9, kind: input, shape index: {}]
  %s10 = inlined_call_operand.vmem [shape: f32[1,128], index: 10, kind: input, shape index: {}]
  %s11 = inlined_call_operand.hbm [shape: f32[16,128], index: 11, kind: output, shape index: {}]
  %s12 = sld [smem:[#allocation0]]
  $region70: #{tpu_custom_call.1} parent=0
    _
  %s14 = ssub.s32 1, %s12
  %s15 = scalar_select 0, %s14, %s12
  $region1: #{tpu_custom_call.1} parent=0
    #allocation2 [shape = 'u8[65536]{0}', space=vmem, size = 0x10000, scoped, tag = 'input window, operand 3, single buffered']
    #allocation3 [shape = 's32[1]{0}', space=sflag, size = 0x4, scoped, tag = 'scoped memory for tpu_custom_call.1']
    #allocation4 [shape = 's32[1]{0}', space=sflag, size = 0x4, scoped, tag = 'scoped memory for tpu_custom_call.1']
    #allocation5 [shape = 'u8[65536]{0}', space=vmem, size = 0x10000, scoped, tag = 'input window, operand 5, single buffered']
    #allocation6 [shape = 's32[1]{0}', space=sflag, size = 0x4, scoped, tag = 'scoped memory for tpu_custom_call.1']
    #allocation7 [shape = 'u8[65536]{0}', space=vmem, size = 0x10000, scoped, tag = 'input window, operand 7, single buffered']
    #allocation8 [shape = 'u8[65536]{0}', space=vmem, size = 0x10000, scoped, tag = 'input window, operand 9, single buffered']
    #allocation9 [shape = 's32[1]{0}', space=sflag, size = 0x4, scoped, tag = 'scoped memory for tpu_custom_call.1']
    #allocation10 [shape = 'u8[8192]{0}', space=vmem, size = 0x2000, scoped, tag = 'output window, operand 0, single buffered']
    %16 = vsyncpa [#allocation3], 0
    %17 = vsyncpa [#allocation6], 0
    %18 = vsyncpa [#allocation9], 0
    %19 = vsyncpa [#allocation4], 0
    // Predicated region
    $region2: #{tpu_custom_call.1} parent=1 // pred_check
      _
    $region3: #{tpu_custom_call.1} parent=1 // pred_check_branch
      %21 = sbr.rel (0) target = $region5
    $region4: #{tpu_custom_call.1} parent=1 // pred_region
      _
    $region5: #{tpu_custom_call.1} parent=1 // pred_fallthru
      _
    // Predicated region
    $region6: #{tpu_custom_call.1} parent=1 // pred_check
      _
    $region7: #{tpu_custom_call.1} parent=1 // pred_check_branch
      %23 = sbr.rel (0) target = $region9
    $region8: #{tpu_custom_call.1} parent=1 // pred_region
      _
    $region9: #{tpu_custom_call.1} parent=1 // pred_fallthru
      _
    // Predicated region
    $region10: #{tpu_custom_call.1} parent=1 // pred_check
      _
    $region11: #{tpu_custom_call.1} parent=1 // pred_check_branch
      %25 = sbr.rel (0) target = $region13
    $region12: #{tpu_custom_call.1} parent=1 // pred_region
      _
    $region13: #{tpu_custom_call.1} parent=1 // pred_fallthru
      _
    // Predicated region
    $region14: #{tpu_custom_call.1} parent=1 // pred_check
      _
    $region15: #{tpu_custom_call.1} parent=1 // pred_check_branch
      %27 = sbr.rel (0) target = $region17
    $region16: #{tpu_custom_call.1} parent=1 // pred_region
      %s29 = ssub.s32 2048, 2048
      %30 = vsyncadd [#allocation3], %s29
      %s31 = sshll.u32 [#allocation2], 4
      %s32 = int_to_ptr.vmem [resolvable:$true] %s31
      %37 = dma.hbm_to_vmem [thread:$0]  %s3, 2048, %s32, [#allocation3], 128, 128, 8
    $region17: #{tpu_custom_call.1} parent=1 // pred_fallthru
      _
    // Predicated region
    $region18: #{tpu_custom_call.1} parent=1 // pred_check
      _
    $region19: #{tpu_custom_call.1} parent=1 // pred_check_branch
      %39 = sbr.rel (0) target = $region21
    $region20: #{tpu_custom_call.1} parent=1 // pred_region
      _
    $region21: #{tpu_custom_call.1} parent=1 // pred_fallthru
      _
    // Predicated region
    $region22: #{tpu_custom_call.1} parent=1 // pred_check
      _
    $region23: #{tpu_custom_call.1} parent=1 // pred_check_branch
      %41 = sbr.rel (0) target = $region25
    $region24: #{tpu_custom_call.1} parent=1 // pred_region
      %s43 = ssub.s32 2048, 2048
      %44 = vsyncadd [#allocation6], %s43
      %s45 = sshll.u32 [#allocation5], 4
      %s46 = int_to_ptr.vmem [resolvable:$true] %s45
      %51 = dma.hbm_to_vmem [thread:$0]  %s5, 2048, %s46, [#allocation6], 128, 128, 8
    $region25: #{tpu_custom_call.1} parent=1 // pred_fallthru
      _
    // Predicated region
    $region26: #{tpu_custom_call.1} parent=1 // pred_check
      _
    $region27: #{tpu_custom_call.1} parent=1 // pred_check_branch
      %53 = sbr.rel (0) target = $region29
    $region28: #{tpu_custom_call.1} parent=1 // pred_region
      _
    $region29: #{tpu_custom_call.1} parent=1 // pred_fallthru
      _
    // Predicated region
    $region30: #{tpu_custom_call.1} parent=1 // pred_check
      _
    $region31: #{tpu_custom_call.1} parent=1 // pred_check_branch
      %55 = sbr.rel (0) target = $region33
    $region32: #{tpu_custom_call.1} parent=1 // pred_region
      %s57 = ssub.s32 2048, 2048
      %58 = vsyncadd [#allocation6], %s57
      %s59 = sshll.u32 [#allocation7], 4
      %s60 = int_to_ptr.vmem [resolvable:$true] %s59
      %65 = dma.hbm_to_vmem [thread:$0]  %s7, 2048, %s60, [#allocation6], 128, 128, 8
    $region33: #{tpu_custom_call.1} parent=1 // pred_fallthru
      _
    // Predicated region
    $region34: #{tpu_custom_call.1} parent=1 // pred_check
      _
    $region35: #{tpu_custom_call.1} parent=1 // pred_check_branch
      %67 = sbr.rel (0) target = $region37
    $region36: #{tpu_custom_call.1} parent=1 // pred_region
      _
    $region37: #{tpu_custom_call.1} parent=1 // pred_fallthru
      _
    // Predicated region
    $region38: #{tpu_custom_call.1} parent=1 // pred_check
      _
    $region39: #{tpu_custom_call.1} parent=1 // pred_check_branch
      %69 = sbr.rel (0) target = $region41
    $region40: #{tpu_custom_call.1} parent=1 // pred_region
      %s71 = ssub.s32 2048, 2048
      %72 = vsyncadd [#allocation9], %s71
      %s73 = sshll.u32 [#allocation8], 4
      %s74 = int_to_ptr.vmem [resolvable:$true] %s73
      %79 = dma.hbm_to_vmem [thread:$0]  %s9, 2048, %s74, [#allocation9], 128, 128, 8
    $region41: #{tpu_custom_call.1} parent=1 // pred_fallthru
      _
    // Predicated region
    $region42: #{tpu_custom_call.1} parent=1 // pred_check
      _
    $region43: #{tpu_custom_call.1} parent=1 // pred_check_branch
      %81 = sbr.rel (0) target = $region45
    $region44: #{tpu_custom_call.1} parent=1 // pred_region
      _
    $region45: #{tpu_custom_call.1} parent=1 // pred_fallthru
      _
    // Predicated region
    $region46: #{tpu_custom_call.1} parent=1 // pred_check
      _
    $region47: #{tpu_custom_call.1} parent=1 // pred_check_branch
      %83 = sbr.rel (0) target = $region49
    $region48: #{tpu_custom_call.1} parent=1 // pred_region
      %84 = dma.done [#allocation3], 2048
    $region49: #{tpu_custom_call.1} parent=1 // pred_fallthru
      _
    // Predicated region
    $region50: #{tpu_custom_call.1} parent=1 // pred_check
      _
    $region51: #{tpu_custom_call.1} parent=1 // pred_check_branch
      %86 = sbr.rel (0) target = $region53
    $region52: #{tpu_custom_call.1} parent=1 // pred_region
      %87 = dma.done [#allocation6], 2048
    $region53: #{tpu_custom_call.1} parent=1 // pred_fallthru
      _
    // Predicated region
    $region54: #{tpu_custom_call.1} parent=1 // pred_check
      _
    $region55: #{tpu_custom_call.1} parent=1 // pred_check_branch
      %89 = sbr.rel (0) target = $region57
    $region56: #{tpu_custom_call.1} parent=1 // pred_region
      %90 = dma.done [#allocation6], 2048
    $region57: #{tpu_custom_call.1} parent=1 // pred_fallthru
      _
    // Predicated region
    $region58: #{tpu_custom_call.1} parent=1 // pred_check
      _
    $region59: #{tpu_custom_call.1} parent=1 // pred_check_branch
      %92 = sbr.rel (0) target = $region61
    $region60: #{tpu_custom_call.1} parent=1 // pred_region
      %93 = dma.done [#allocation9], 2048
    $region61: #{tpu_custom_call.1} parent=1 // pred_fallthru
      _
    %v94 = vld [vmem:[%s0] sm:$0xff]
    %v95 = vld [vmem:[%s0 + $0x8] sm:$0xff]
    %v96 = vld [vmem:[%s1] sm:$0xff]
    %v97 = vld [vmem:[%s2] sm:$0x1]
    %v99 = vlaneseq
    %v100 = vshrl.u32 %v99, 7
    %v101 = vsub.s32 0, %v100
    %v102 = vrot.slane %v97, %v101
    %vm104 = vcmask 64512
    %v106 = vsel %vm104, %v94, 0
    %v109 = vsel %vm104, %v95, 0
    %111 = vmatprep.subr.mxu0 0.0
    %112 = vmatpush1.msra.mxu0 %v96
    %113 = vmatprep.subr.mxu0 0.0
    %114 = vmatpush1.msra.mxu0 0.0
    %115 = vmatprep.subr.mxu0 0.0
    %116 = vmatpush1.msra.mxu0 0.0
    %117 = vmatprep.subr.mxu0 0.0
    %118 = vmatpush1.msra.mxu0 0.0
    %119 = vmatprep.subr.mxu0 0.0
    %120 = vmatpush1.msra.mxu0 0.0
    %121 = vmatprep.subr.mxu0 0.0
    %122 = vmatpush1.msra.mxu0 0.0
    %123 = vmatprep.subr.mxu0 0.0
    %124 = vmatpush1.msra.mxu0 0.0
    %125 = vmatprep.subr.mxu0 0.0
    %126 = vmatpush1.msra.mxu0 0.0
    %127 = vmatprep.subr.mxu0 0.0
    %128 = vmatpush1.msra.mxu0 0.0
    %129 = vmatprep.subr.mxu0 0.0
    %130 = vmatpush1.msra.mxu0 0.0
    %131 = vmatprep.subr.mxu0 0.0
    %132 = vmatpush1.msra.mxu0 0.0
    %133 = vmatprep.subr.mxu0 0.0
    %134 = vmatpush1.msra.mxu0 0.0
    %135 = vmatprep.subr.mxu0 0.0
    %136 = vmatpush1.msra.mxu0 0.0
    %137 = vmatprep.subr.mxu0 0.0
    %138 = vmatpush1.msra.mxu0 0.0
    %139 = vmatprep.subr.mxu0 0.0
    %140 = vmatpush1.msra.mxu0 0.0
    %141 = vmatprep.subr.mxu0 0.0
    %142 = vmatpush1.msra.mxu0 0.0
    %143 = vmatprep.subr.mxu0 0.0
    %144 = vmatpush1.msra.mxu0 0.0
    %145 = vmatprep.subr.mxu0 0.0
    %146 = vmatpush1.msra.mxu0 0.0
    %147 = vmatprep.subr.mxu0 0.0
    %148 = vmatpush1.msra.mxu0 0.0
    %149 = vmatprep.subr.mxu0 0.0
    %150 = vmatpush1.msra.mxu0 0.0
    %151 = vmatprep.subr.mxu0 0.0
    %152 = vmatpush1.msra.mxu0 0.0
    %153 = vmatprep.subr.mxu0 0.0
    %154 = vmatpush1.msra.mxu0 0.0
    %155 = vmatprep.subr.mxu0 0.0
    %156 = vmatpush1.msra.mxu0 0.0
    %157 = vmatprep.subr.mxu0 0.0
    %158 = vmatpush1.msra.mxu0 0.0
    %159 = vmatprep.subr.mxu0 0.0
    %160 = vmatpush1.msra.mxu0 0.0
    %161 = vmatprep.subr.mxu0 0.0
    %162 = vmatpush1.msra.mxu0 0.0
    %163 = vmatprep.subr.mxu0 0.0
    %164 = vmatpush1.msra.mxu0 0.0
    %165 = vmatprep.subr.mxu0 0.0
    %166 = vmatpush1.msra.mxu0 0.0
    %167 = vmatprep.subr.mxu0 0.0
    %168 = vmatpush1.msra.mxu0 0.0
    %169 = vmatprep.subr.mxu0 0.0
    %170 = vmatpush1.msra.mxu0 0.0
    %171 = vmatprep.subr.mxu0 0.0
    %172 = vmatpush1.msra.mxu0 0.0
    %173 = vmatprep.subr.mxu0 0.0
    %174 = vmatpush1.msra.mxu0 0.0
    %175 = vmatprep.mubr.f32.mxu0 0.0
    %176 = vmatmul.mubr.f32.gmra.mrb[0].mxu0 %v106
    %v177 = vpop.f32.mrb[0].mxu0
    %v178 = vadd.f32 %v102, %v177
    %v179 = vpop.f32.mrb[0].mxu0
    %180 = vmatprep.mubr.f32.mxu0 0.0
    %181 = vmatmul.mubr.f32.gmra.mrb[0].mxu0 %v109
    %v182 = vpop.f32.mrb[0].mxu0
    %v183 = vadd.f32 %v102, %v182
    %v184 = vpop.f32.mrb[0].mxu0
    %185 = vdwg.mxu0
    %vm186 = vcmp.gt.f32.partialorder %v178, 0.0
    %vm187 = vcmp.gt.f32.partialorder %v183, 0.0
    %v188 = vmul.f32 %v178, 1.442695
    %v189 = vpow.pop %v188
    %v190 = vmul.f32 %v183, 1.442695
    %v191 = vpow.pop %v190
    %v192 = vsub.f32 %v189, 1.0
    %v193 = vsub.f32 %v191, 1.0
    %v194 = vmul.f32 %v192, 1.6732632
    %v195 = vmul.f32 %v193, 1.6732632
    %v196 = vsel %vm186, %v178, %v194
    %v197 = vsel %vm187, %v183, %v195
    %v198 = vmul.f32 %v196, 1.050701
    %v199 = vmul.f32 %v197, 1.050701
    %v200 = vld [vmem:[#allocation2] sm:$0xff]
    %v201 = vld [vmem:[#allocation2 + $0x8] sm:$0xff]
    %v202 = vld [vmem:[#allocation2 + $0x10] sm:$0xff]
    %v203 = vld [vmem:[#allocation2 + $0x18] sm:$0xff]
    %v204 = vld [vmem:[#allocation2 + $0x20] sm:$0xff]
    %v205 = vld [vmem:[#allocation2 + $0x28] sm:$0xff]
    %v206 = vld [vmem:[#allocation2 + $0x30] sm:$0xff]
    %v207 = vld [vmem:[#allocation2 + $0x38] sm:$0xff]
    %v208 = vld [vmem:[#allocation2 + $0x40] sm:$0xff]
    %v209 = vld [vmem:[#allocation2 + $0x48] sm:$0xff]
    %v210 = vld [vmem:[#allocation2 + $0x50] sm:$0xff]
    %v211 = vld [vmem:[#allocation2 + $0x58] sm:$0xff]
    %v212 = vld [vmem:[#allocation2 + $0x60] sm:$0xff]
    %v213 = vld [vmem:[#allocation2 + $0x68] sm:$0xff]
    %v214 = vld [vmem:[#allocation2 + $0x70] sm:$0xff]
    %v215 = vld [vmem:[#allocation2 + $0x78] sm:$0xff]
    %v216 = vld [vmem:[%s4] sm:$0x1]
    %v218 = vlaneseq
    %v219 = vshrl.u32 %v218, 7
    %v220 = vsub.s32 0, %v219
    %v221 = vrot.slane %v216, %v220
    %223 = vmatprep.subr.mxu0 0.0
    %224 = vmatpush1.msra.mxu0 %v200
    %225 = vmatprep.subr.mxu0 0.0
    %226 = vmatpush1.msra.mxu0 %v201
    %227 = vmatprep.subr.mxu0 0.0
    %228 = vmatpush1.msra.mxu0 %v202
    %229 = vmatprep.subr.mxu0 0.0
    %230 = vmatpush1.msra.mxu0 %v203
    %231 = vmatprep.subr.mxu0 0.0
    %232 = vmatpush1.msra.mxu0 %v204
    %233 = vmatprep.subr.mxu0 0.0
    %234 = vmatpush1.msra.mxu0 %v205
    %235 = vmatprep.subr.mxu0 0.0
    %236 = vmatpush1.msra.mxu0 %v206
    %237 = vmatprep.subr.mxu0 0.0
    %238 = vmatpush1.msra.mxu0 %v207
    %239 = vmatprep.subr.mxu0 0.0
    %240 = vmatpush1.msra.mxu0 %v208
    %241 = vmatprep.subr.mxu0 0.0
    %242 = vmatpush1.msra.mxu0 %v209
    %243 = vmatprep.subr.mxu0 0.0
    %244 = vmatpush1.msra.mxu0 %v210
    %245 = vmatprep.subr.mxu0 0.0
    %246 = vmatpush1.msra.mxu0 %v211
    %247 = vmatprep.subr.mxu0 0.0
    %248 = vmatpush1.msra.mxu0 %v212
    %249 = vmatprep.subr.mxu0 0.0
    %250 = vmatpush1.msra.mxu0 %v213
    %251 = vmatprep.subr.mxu0 0.0
    %252 = vmatpush1.msra.mxu0 %v214
    %253 = vmatprep.subr.mxu0 0.0
    %254 = vmatpush1.msra.mxu0 %v215
    %255 = vmatprep.subr.mxu0 0.0
    %256 = vmatpush1.msra.mxu0 0.0
    %257 = vmatprep.subr.mxu0 0.0
    %258 = vmatpush1.msra.mxu0 0.0
    %259 = vmatprep.subr.mxu0 0.0
    %260 = vmatpush1.msra.mxu0 0.0
    %261 = vmatprep.subr.mxu0 0.0
    %262 = vmatpush1.msra.mxu0 0.0
    %263 = vmatprep.subr.mxu0 0.0
    %264 = vmatpush1.msra.mxu0 0.0
    %265 = vmatprep.subr.mxu0 0.0
    %266 = vmatpush1.msra.mxu0 0.0
    %267 = vmatprep.subr.mxu0 0.0
    %268 = vmatpush1.msra.mxu0 0.0
    %269 = vmatprep.subr.mxu0 0.0
    %270 = vmatpush1.msra.mxu0 0.0
    %271 = vmatprep.subr.mxu0 0.0
    %272 = vmatpush1.msra.mxu0 0.0
    %273 = vmatprep.subr.mxu0 0.0
    %274 = vmatpush1.msra.mxu0 0.0
    %275 = vmatprep.subr.mxu0 0.0
    %276 = vmatpush1.msra.mxu0 0.0
    %277 = vmatprep.subr.mxu0 0.0
    %278 = vmatpush1.msra.mxu0 0.0
    %279 = vmatprep.subr.mxu0 0.0
    %280 = vmatpush1.msra.mxu0 0.0
    %281 = vmatprep.subr.mxu0 0.0
    %282 = vmatpush1.msra.mxu0 0.0
    %283 = vmatprep.subr.mxu0 0.0
    %284 = vmatpush1.msra.mxu0 0.0
    %285 = vmatprep.subr.mxu0 0.0
    %286 = vmatpush1.msra.mxu0 0.0
    %287 = vmatprep.mubr.f32.mxu0 0.0
    %288 = vmatmul.mubr.f32.gmra.mrb[0].mxu0 %v198
    %v289 = vpop.f32.mrb[0].mxu0
    %v290 = vadd.f32 %v221, %v289
    %v291 = vpop.f32.mrb[0].mxu0
    %292 = vmatprep.mubr.f32.mxu0 0.0
    %293 = vmatmul.mubr.f32.gmra.mrb[0].mxu0 %v199
    %v294 = vpop.f32.mrb[0].mxu0
    %v295 = vadd.f32 %v221, %v294
    %v296 = vpop.f32.mrb[0].mxu0
    %297 = vdwg.mxu0
    %vm298 = vcmp.gt.f32.partialorder %v290, 0.0
    %vm299 = vcmp.gt.f32.partialorder %v295, 0.0
    %v300 = vmul.f32 %v290, 1.442695
    %v301 = vpow.pop %v300
    %v302 = vmul.f32 %v295, 1.442695
    %v303 = vpow.pop %v302
    %v304 = vsub.f32 %v301, 1.0
    %v305 = vsub.f32 %v303, 1.0
    %v306 = vmul.f32 %v304, 1.6732632
    %v307 = vmul.f32 %v305, 1.6732632
    %v308 = vsel %vm298, %v290, %v306
    %v309 = vsel %vm299, %v295, %v307
    %v310 = vmul.f32 %v308, 1.050701
    %v311 = vmul.f32 %v309, 1.050701
    %v312 = vld [vmem:[#allocation5] sm:$0xff]
    %v313 = vld [vmem:[#allocation5 + $0x8] sm:$0xff]
    %v314 = vld [vmem:[#allocation5 + $0x10] sm:$0xff]
    %v315 = vld [vmem:[#allocation5 + $0x18] sm:$0xff]
    %v316 = vld [vmem:[#allocation5 + $0x20] sm:$0xff]
    %v317 = vld [vmem:[#allocation5 + $0x28] sm:$0xff]
    %v318 = vld [vmem:[#allocation5 + $0x30] sm:$0xff]
    %v319 = vld [vmem:[#allocation5 + $0x38] sm:$0xff]
    %v320 = vld [vmem:[#allocation5 + $0x40] sm:$0xff]
    %v321 = vld [vmem:[#allocation5 + $0x48] sm:$0xff]
    %v322 = vld [vmem:[#allocation5 + $0x50] sm:$0xff]
    %v323 = vld [vmem:[#allocation5 + $0x58] sm:$0xff]
    %v324 = vld [vmem:[#allocation5 + $0x60] sm:$0xff]
    %v325 = vld [vmem:[#allocation5 + $0x68] sm:$0xff]
    %v326 = vld [vmem:[#allocation5 + $0x70] sm:$0xff]
    %v327 = vld [vmem:[#allocation5 + $0x78] sm:$0xff]
    %v328 = vld [vmem:[%s6] sm:$0x1]
    %v330 = vlaneseq
    %v331 = vshrl.u32 %v330, 7
    %v332 = vsub.s32 0, %v331
    %v333 = vrot.slane %v328, %v332
    %335 = vmatprep.subr.mxu0 0.0
    %336 = vmatpush1.msra.mxu0 %v312
    %337 = vmatprep.subr.mxu0 0.0
    %338 = vmatpush1.msra.mxu0 %v313
    %339 = vmatprep.subr.mxu0 0.0
    %340 = vmatpush1.msra.mxu0 %v314
    %341 = vmatprep.subr.mxu0 0.0
    %342 = vmatpush1.msra.mxu0 %v315
    %343 = vmatprep.subr.mxu0 0.0
    %344 = vmatpush1.msra.mxu0 %v316
    %345 = vmatprep.subr.mxu0 0.0
    %346 = vmatpush1.msra.mxu0 %v317
    %347 = vmatprep.subr.mxu0 0.0
    %348 = vmatpush1.msra.mxu0 %v318
    %349 = vmatprep.subr.mxu0 0.0
    %350 = vmatpush1.msra.mxu0 %v319
    %351 = vmatprep.subr.mxu0 0.0
    %352 = vmatpush1.msra.mxu0 %v320
    %353 = vmatprep.subr.mxu0 0.0
    %354 = vmatpush1.msra.mxu0 %v321
    %355 = vmatprep.subr.mxu0 0.0
    %356 = vmatpush1.msra.mxu0 %v322
    %357 = vmatprep.subr.mxu0 0.0
    %358 = vmatpush1.msra.mxu0 %v323
    %359 = vmatprep.subr.mxu0 0.0
    %360 = vmatpush1.msra.mxu0 %v324
    %361 = vmatprep.subr.mxu0 0.0
    %362 = vmatpush1.msra.mxu0 %v325
    %363 = vmatprep.subr.mxu0 0.0
    %364 = vmatpush1.msra.mxu0 %v326
    %365 = vmatprep.subr.mxu0 0.0
    %366 = vmatpush1.msra.mxu0 %v327
    %367 = vmatprep.subr.mxu0 0.0
    %368 = vmatpush1.msra.mxu0 0.0
    %369 = vmatprep.subr.mxu0 0.0
    %370 = vmatpush1.msra.mxu0 0.0
    %371 = vmatprep.subr.mxu0 0.0
    %372 = vmatpush1.msra.mxu0 0.0
    %373 = vmatprep.subr.mxu0 0.0
    %374 = vmatpush1.msra.mxu0 0.0
    %375 = vmatprep.subr.mxu0 0.0
    %376 = vmatpush1.msra.mxu0 0.0
    %377 = vmatprep.subr.mxu0 0.0
    %378 = vmatpush1.msra.mxu0 0.0
    %379 = vmatprep.subr.mxu0 0.0
    %380 = vmatpush1.msra.mxu0 0.0
    %381 = vmatprep.subr.mxu0 0.0
    %382 = vmatpush1.msra.mxu0 0.0
    %383 = vmatprep.subr.mxu0 0.0
    %384 = vmatpush1.msra.mxu0 0.0
    %385 = vmatprep.subr.mxu0 0.0
    %386 = vmatpush1.msra.mxu0 0.0
    %387 = vmatprep.subr.mxu0 0.0
    %388 = vmatpush1.msra.mxu0 0.0
    %389 = vmatprep.subr.mxu0 0.0
    %390 = vmatpush1.msra.mxu0 0.0
    %391 = vmatprep.subr.mxu0 0.0
    %392 = vmatpush1.msra.mxu0 0.0
    %393 = vmatprep.subr.mxu0 0.0
    %394 = vmatpush1.msra.mxu0 0.0
    %395 = vmatprep.subr.mxu0 0.0
    %396 = vmatpush1.msra.mxu0 0.0
    %397 = vmatprep.subr.mxu0 0.0
    %398 = vmatpush1.msra.mxu0 0.0
    %399 = vmatprep.mubr.f32.mxu0 0.0
    %400 = vmatmul.mubr.f32.gmra.mrb[0].mxu0 %v310
    %v401 = vpop.f32.mrb[0].mxu0
    %v402 = vadd.f32 %v333, %v401
    %v403 = vpop.f32.mrb[0].mxu0
    %404 = vmatprep.mubr.f32.mxu0 0.0
    %405 = vmatmul.mubr.f32.gmra.mrb[0].mxu0 %v311
    %v406 = vpop.f32.mrb[0].mxu0
    %v407 = vadd.f32 %v333, %v406
    %v408 = vpop.f32.mrb[0].mxu0
    %409 = vdwg.mxu0
    %vm410 = vcmp.gt.f32.partialorder %v402, 0.0
    %vm411 = vcmp.gt.f32.partialorder %v407, 0.0
    %v412 = vmul.f32 %v402, 1.442695
    %v413 = vpow.pop %v412
    %v414 = vmul.f32 %v407, 1.442695
    %v415 = vpow.pop %v414
    %v416 = vsub.f32 %v413, 1.0
    %v417 = vsub.f32 %v415, 1.0
    %v418 = vmul.f32 %v416, 1.6732632
    %v419 = vmul.f32 %v417, 1.6732632
    %v420 = vsel %vm410, %v402, %v418
    %v421 = vsel %vm411, %v407, %v419
    %v422 = vmul.f32 %v420, 1.050701
    %v423 = vmul.f32 %v421, 1.050701
    %v424 = vld [vmem:[#allocation7] sm:$0xff]
    %v425 = vld [vmem:[#allocation7 + $0x8] sm:$0xff]
    %v426 = vld [vmem:[#allocation7 + $0x10] sm:$0xff]
    %v427 = vld [vmem:[#allocation7 + $0x18] sm:$0xff]
    %v428 = vld [vmem:[#allocation7 + $0x20] sm:$0xff]
    %v429 = vld [vmem:[#allocation7 + $0x28] sm:$0xff]
    %v430 = vld [vmem:[#allocation7 + $0x30] sm:$0xff]
    %v431 = vld [vmem:[#allocation7 + $0x38] sm:$0xff]
    %v432 = vld [vmem:[#allocation7 + $0x40] sm:$0xff]
    %v433 = vld [vmem:[#allocation7 + $0x48] sm:$0xff]
    %v434 = vld [vmem:[#allocation7 + $0x50] sm:$0xff]
    %v435 = vld [vmem:[#allocation7 + $0x58] sm:$0xff]
    %v436 = vld [vmem:[#allocation7 + $0x60] sm:$0xff]
    %v437 = vld [vmem:[#allocation7 + $0x68] sm:$0xff]
    %v438 = vld [vmem:[#allocation7 + $0x70] sm:$0xff]
    %v439 = vld [vmem:[#allocation7 + $0x78] sm:$0xff]
    %v440 = vld [vmem:[%s8] sm:$0x1]
    %v442 = vlaneseq
    %v443 = vshrl.u32 %v442, 7
    %v444 = vsub.s32 0, %v443
    %v445 = vrot.slane %v440, %v444
    %447 = vmatprep.subr.mxu0 0.0
    %448 = vmatpush1.msra.mxu0 %v424
    %449 = vmatprep.subr.mxu0 0.0
    %450 = vmatpush1.msra.mxu0 %v425
    %451 = vmatprep.subr.mxu0 0.0
    %452 = vmatpush1.msra.mxu0 %v426
    %453 = vmatprep.subr.mxu0 0.0
    %454 = vmatpush1.msra.mxu0 %v427
    %455 = vmatprep.subr.mxu0 0.0
    %456 = vmatpush1.msra.mxu0 %v428
    %457 = vmatprep.subr.mxu0 0.0
    %458 = vmatpush1.msra.mxu0 %v429
    %459 = vmatprep.subr.mxu0 0.0
    %460 = vmatpush1.msra.mxu0 %v430
    %461 = vmatprep.subr.mxu0 0.0
    %462 = vmatpush1.msra.mxu0 %v431
    %463 = vmatprep.subr.mxu0 0.0
    %464 = vmatpush1.msra.mxu0 %v432
    %465 = vmatprep.subr.mxu0 0.0
    %466 = vmatpush1.msra.mxu0 %v433
    %467 = vmatprep.subr.mxu0 0.0
    %468 = vmatpush1.msra.mxu0 %v434
    %469 = vmatprep.subr.mxu0 0.0
    %470 = vmatpush1.msra.mxu0 %v435
    %471 = vmatprep.subr.mxu0 0.0
    %472 = vmatpush1.msra.mxu0 %v436
    %473 = vmatprep.subr.mxu0 0.0
    %474 = vmatpush1.msra.mxu0 %v437
    %475 = vmatprep.subr.mxu0 0.0
    %476 = vmatpush1.msra.mxu0 %v438
    %477 = vmatprep.subr.mxu0 0.0
    %478 = vmatpush1.msra.mxu0 %v439
    %479 = vmatprep.subr.mxu0 0.0
    %480 = vmatpush1.msra.mxu0 0.0
    %481 = vmatprep.subr.mxu0 0.0
    %482 = vmatpush1.msra.mxu0 0.0
    %483 = vmatprep.subr.mxu0 0.0
    %484 = vmatpush1.msra.mxu0 0.0
    %485 = vmatprep.subr.mxu0 0.0
    %486 = vmatpush1.msra.mxu0 0.0
    %487 = vmatprep.subr.mxu0 0.0
    %488 = vmatpush1.msra.mxu0 0.0
    %489 = vmatprep.subr.mxu0 0.0
    %490 = vmatpush1.msra.mxu0 0.0
    %491 = vmatprep.subr.mxu0 0.0
    %492 = vmatpush1.msra.mxu0 0.0
    %493 = vmatprep.subr.mxu0 0.0
    %494 = vmatpush1.msra.mxu0 0.0
    %495 = vmatprep.subr.mxu0 0.0
    %496 = vmatpush1.msra.mxu0 0.0
    %497 = vmatprep.subr.mxu0 0.0
    %498 = vmatpush1.msra.mxu0 0.0
    %499 = vmatprep.subr.mxu0 0.0
    %500 = vmatpush1.msra.mxu0 0.0
    %501 = vmatprep.subr.mxu0 0.0
    %502 = vmatpush1.msra.mxu0 0.0
    %503 = vmatprep.subr.mxu0 0.0
    %504 = vmatpush1.msra.mxu0 0.0
    %505 = vmatprep.subr.mxu0 0.0
    %506 = vmatpush1.msra.mxu0 0.0
    %507 = vmatprep.subr.mxu0 0.0
    %508 = vmatpush1.msra.mxu0 0.0
    %509 = vmatprep.subr.mxu0 0.0
    %510 = vmatpush1.msra.mxu0 0.0
    %511 = vmatprep.mubr.f32.mxu0 0.0
    %512 = vmatmul.mubr.f32.gmra.mrb[0].mxu0 %v422
    %v513 = vpop.f32.mrb[0].mxu0
    %v514 = vadd.f32 %v445, %v513
    %v515 = vpop.f32.mrb[0].mxu0
    %516 = vmatprep.mubr.f32.mxu0 0.0
    %517 = vmatmul.mubr.f32.gmra.mrb[0].mxu0 %v423
    %v518 = vpop.f32.mrb[0].mxu0
    %v519 = vadd.f32 %v445, %v518
    %v520 = vpop.f32.mrb[0].mxu0
    %521 = vdwg.mxu0
    %vm522 = vcmp.gt.f32.partialorder %v514, 0.0
    %vm523 = vcmp.gt.f32.partialorder %v519, 0.0
    %v524 = vmul.f32 %v514, 1.442695
    %v525 = vpow.pop %v524
    %v526 = vmul.f32 %v519, 1.442695
    %v527 = vpow.pop %v526
    %v528 = vsub.f32 %v525, 1.0
    %v529 = vsub.f32 %v527, 1.0
    %v530 = vmul.f32 %v528, 1.6732632
    %v531 = vmul.f32 %v529, 1.6732632
    %v532 = vsel %vm522, %v514, %v530
    %v533 = vsel %vm523, %v519, %v531
    %v534 = vmul.f32 %v532, 1.050701
    %v535 = vmul.f32 %v533, 1.050701
    %v536 = vld [vmem:[#allocation8] sm:$0xff]
    %v537 = vld [vmem:[#allocation8 + $0x8] sm:$0xff]
    %v538 = vld [vmem:[#allocation8 + $0x10] sm:$0xff]
    %v539 = vld [vmem:[#allocation8 + $0x18] sm:$0xff]
    %v540 = vld [vmem:[#allocation8 + $0x20] sm:$0xff]
    %v541 = vld [vmem:[#allocation8 + $0x28] sm:$0xff]
    %v542 = vld [vmem:[#allocation8 + $0x30] sm:$0xff]
    %v543 = vld [vmem:[#allocation8 + $0x38] sm:$0xff]
    %v544 = vld [vmem:[#allocation8 + $0x40] sm:$0xff]
    %v545 = vld [vmem:[#allocation8 + $0x48] sm:$0xff]
    %v546 = vld [vmem:[#allocation8 + $0x50] sm:$0xff]
    %v547 = vld [vmem:[#allocation8 + $0x58] sm:$0xff]
    %v548 = vld [vmem:[#allocation8 + $0x60] sm:$0xff]
    %v549 = vld [vmem:[#allocation8 + $0x68] sm:$0xff]
    %v550 = vld [vmem:[#allocation8 + $0x70] sm:$0xff]
    %v551 = vld [vmem:[#allocation8 + $0x78] sm:$0xff]
    %v552 = vld [vmem:[%s10] sm:$0x1]
    %v554 = vlaneseq
    %v555 = vshrl.u32 %v554, 7
    %v556 = vsub.s32 0, %v555
    %v557 = vrot.slane %v552, %v556
    %559 = vmatprep.subr.mxu0 0.0
    %560 = vmatpush1.msra.mxu0 %v536
    %561 = vmatprep.subr.mxu0 0.0
    %562 = vmatpush1.msra.mxu0 %v537
    %563 = vmatprep.subr.mxu0 0.0
    %564 = vmatpush1.msra.mxu0 %v538
    %565 = vmatprep.subr.mxu0 0.0
    %566 = vmatpush1.msra.mxu0 %v539
    %567 = vmatprep.subr.mxu0 0.0
    %568 = vmatpush1.msra.mxu0 %v540
    %569 = vmatprep.subr.mxu0 0.0
    %570 = vmatpush1.msra.mxu0 %v541
    %571 = vmatprep.subr.mxu0 0.0
    %572 = vmatpush1.msra.mxu0 %v542
    %573 = vmatprep.subr.mxu0 0.0
    %574 = vmatpush1.msra.mxu0 %v543
    %575 = vmatprep.subr.mxu0 0.0
    %576 = vmatpush1.msra.mxu0 %v544
    %577 = vmatprep.subr.mxu0 0.0
    %578 = vmatpush1.msra.mxu0 %v545
    %579 = vmatprep.subr.mxu0 0.0
    %580 = vmatpush1.msra.mxu0 %v546
    %581 = vmatprep.subr.mxu0 0.0
    %582 = vmatpush1.msra.mxu0 %v547
    %583 = vmatprep.subr.mxu0 0.0
    %584 = vmatpush1.msra.mxu0 %v548
    %585 = vmatprep.subr.mxu0 0.0
    %586 = vmatpush1.msra.mxu0 %v549
    %587 = vmatprep.subr.mxu0 0.0
    %588 = vmatpush1.msra.mxu0 %v550
    %589 = vmatprep.subr.mxu0 0.0
    %590 = vmatpush1.msra.mxu0 %v551
    %591 = vmatprep.subr.mxu0 0.0
    %592 = vmatpush1.msra.mxu0 0.0
    %593 = vmatprep.subr.mxu0 0.0
    %594 = vmatpush1.msra.mxu0 0.0
    %595 = vmatprep.subr.mxu0 0.0
    %596 = vmatpush1.msra.mxu0 0.0
    %597 = vmatprep.subr.mxu0 0.0
    %598 = vmatpush1.msra.mxu0 0.0
    %599 = vmatprep.subr.mxu0 0.0
    %600 = vmatpush1.msra.mxu0 0.0
    %601 = vmatprep.subr.mxu0 0.0
    %602 = vmatpush1.msra.mxu0 0.0
    %603 = vmatprep.subr.mxu0 0.0
    %604 = vmatpush1.msra.mxu0 0.0
    %605 = vmatprep.subr.mxu0 0.0
    %606 = vmatpush1.msra.mxu0 0.0
    %607 = vmatprep.subr.mxu0 0.0
    %608 = vmatpush1.msra.mxu0 0.0
    %609 = vmatprep.subr.mxu0 0.0
    %610 = vmatpush1.msra.mxu0 0.0
    %611 = vmatprep.subr.mxu0 0.0
    %612 = vmatpush1.msra.mxu0 0.0
    %613 = vmatprep.subr.mxu0 0.0
    %614 = vmatpush1.msra.mxu0 0.0
    %615 = vmatprep.subr.mxu0 0.0
    %616 = vmatpush1.msra.mxu0 0.0
    %617 = vmatprep.subr.mxu0 0.0
    %618 = vmatpush1.msra.mxu0 0.0
    %619 = vmatprep.subr.mxu0 0.0
    %620 = vmatpush1.msra.mxu0 0.0
    %621 = vmatprep.subr.mxu0 0.0
    %622 = vmatpush1.msra.mxu0 0.0
    %623 = vmatprep.mubr.f32.mxu0 0.0
    %624 = vmatmul.mubr.f32.gmra.mrb[0].mxu0 %v534
    %v625 = vpop.f32.mrb[0].mxu0
    %v626 = vadd.f32 %v557, %v625
    %v627 = vpop.f32.mrb[0].mxu0
    %628 = vmatprep.mubr.f32.mxu0 0.0
    %629 = vmatmul.mubr.f32.gmra.mrb[0].mxu0 %v535
    %v630 = vpop.f32.mrb[0].mxu0
    %v631 = vadd.f32 %v557, %v630
    %v632 = vpop.f32.mrb[0].mxu0
    %633 = vdwg.mxu0
    %v634 = vand.u32 2147483647, %v626
    %v635 = vand.u32 2147483647, %v631
    %v636 = vsub.f32 0.0, %v634
    %v637 = vsub.f32 0.0, %v635
    %v638 = vmul.f32 %v636, 1.442695
    %v639 = vpow.pop %v638
    %v640 = vmul.f32 %v637, 1.442695
    %v641 = vpow.pop %v640
    %v642 = vadd.f32 %v639, 1.0
    %v643 = vadd.f32 %v641, 1.0
    %v644 = vrcp.pop %v642
    %v645 = vrcp.pop %v643
    %v646 = vmul.f32 %v642, %v644
    %v647 = vmul.f32 %v643, %v645
    %v648 = vsub.f32 2.0, %v646
    %v649 = vsub.f32 2.0, %v647
    %v650 = vmul.f32 %v644, %v648
    %v651 = vmul.f32 %v645, %v649
    %vm652 = vcmp.ge.f32.partialorder %v626, 0.0
    %vm653 = vcmp.ge.f32.partialorder %v631, 0.0
    %v654 = vmul.f32 %v639, %v650
    %v655 = vmul.f32 %v641, %v651
    %v656 = vsel %vm652, %v650, %v654
    %v657 = vsel %vm653, %v651, %v655
    %658 = vst [vmem:[#allocation10] sm:$0xff] %v656
    %659 = vst [vmem:[#allocation10 + $0x8] sm:$0xff] %v657
    // Predicated region
    $region62: #{tpu_custom_call.1} parent=1 // pred_check
      _
    $region63: #{tpu_custom_call.1} parent=1 // pred_check_branch
      %661 = sbr.rel (0) target = $region65
    $region64: #{tpu_custom_call.1} parent=1 // pred_region
      %s663 = ssub.s32 256, 256
      %664 = vsyncadd [#allocation4], %s663
      %s665 = sshll.u32 [#allocation10], 4
      %s666 = int_to_ptr.vmem [resolvable:$true] %s665
      %671 = dma.vmem_to_hbm [thread:$0]  %s666, 256, %s11, [#allocation4], 128, 128, 8
    $region65: #{tpu_custom_call.1} parent=1 // pred_fallthru
      _
    // Predicated region
    $region66: #{tpu_custom_call.1} parent=1 // pred_check
      _
    $region67: #{tpu_custom_call.1} parent=1 // pred_check_branch
      %673 = sbr.rel (0) target = $region69
    $region68: #{tpu_custom_call.1} parent=1 // pred_region
      %674 = dma.done [#allocation4], 256
    $region69: #{tpu_custom_call.1} parent=1 // pred_fallthru
      _
    %675 = vsyncpa [#allocation3], 1
    %676 = vsyncpa [#allocation6], 1
    %677 = vsyncpa [#allocation9], 1
    %678 = vsyncpa [#allocation4], 1

</llo_original>
